<compile_context>
chip_gen: v7x
topology: tpu7x:2x2x1
jax: 0.10.0
libtpu: 0.0.40
codegen_flags: <defaults>
</compile_context>

<pallas_src>
import jax
import jax.numpy as jnp
from jax.experimental import pallas as pl
from jax.experimental.pallas import tpu as pltpu


_LANE = 128
_SUBLANE = 8
_VMEM_BUDGET_BYTES = 40 * 1024 * 1024   # per-step budget; safe inside v7x's 64 MiB physical
_VMEM_LIMIT_BYTES = 64 * 1024 * 1024    # raise v5e's 16 MiB scoped default


def _round_up(x, m):
    return (x + m - 1) // m * m


def _attn_combiner_kernel(in1_ref, in2_ref, h1_ref, mask_ref,
                          w1b_ref, w2_ref, b2_ref, out_ref):
    tb, isize_p = out_ref.shape
    seq_p = mask_ref.shape[1]
    hsize_p = w2_ref.shape[1]

    in1 = in1_ref[...]                                   # (tb, isize_p) f32
    in2_flat = in2_ref[...]                              # (tb*S_p, isize_p) compute dtype
    msk = mask_ref[...]                                  # (tb, S_p) f32, 1.0 == masked

    # Main MXU matmul over all tb*S_p rows: h2 = input2 @ W1b (f32 accumulate).
    h2 = jnp.dot(in2_flat, w1b_ref[...],
                 preferred_element_type=jnp.float32)     # (tb*S_p, hsize_p)
    h2 = h2.reshape(tb, seq_p, hsize_p)                  # S_p % 8 == 0 -> aligned split

    # sigmoid(cat(in1, in2) @ W1 + b1) == sigmoid(h2 + (in1 @ W1a + b1))
    h = jax.nn.sigmoid(h2 + h1_ref[...][:, None, :])     # (tb, S_p, hsize_p) f32

    # Scorer(hsize) + sigmoid as a lane reduction (an N=1 matmul would waste the MXU).
    s = jnp.sum(h * w2_ref[...], axis=-1) + b2_ref[...]  # (tb, S_p)
    s = jax.nn.sigmoid(s)

    # nele = (S - mask.sum(-2)) with all-masked rows replaced by 1.  Padded
    # positions are masked, so (S_p - tm_padded) == (S - tm_true).
    tm = jnp.sum(msk, axis=-1, keepdims=True)            # (tb, 1)
    nele = jnp.maximum(jnp.float32(seq_p) - tm, jnp.float32(1.0))
    s = s * pl.reciprocal(nele, approx=True)             # EUP slot, frees VALU
    s = jnp.where(msk > 0.0, jnp.float32(0.0), s)        # masked_fill(mask, 0)

    # out = scores^T @ input2 + (1 - scores.sum(-2)) * input1
    in2_3d = in2_flat.reshape(tb, seq_p, isize_p).astype(jnp.float32)
    pooled = jnp.sum(s[:, :, None] * in2_3d, axis=1)     # (tb, isize_p)
    ssum = jnp.sum(s, axis=-1, keepdims=True)            # (tb, 1)
    out_ref[...] = (pooled + (1.0 - ssum) * in1).astype(out_ref.dtype)


def _step_vmem_bytes(tb, seq_p, isize_p, hsize_p, in_itemsize):
    """Rough per-grid-step VMEM use: double-buffered blocks + f32 temporaries."""
    in2 = 2 * tb * seq_p * isize_p * in_itemsize
    small_io = 2 * tb * (isize_p * 4 + hsize_p * 4 + seq_p * 4 + isize_p * 4)
    weights = 2 * (isize_p * hsize_p * in_itemsize + hsize_p * 4 + 4)
    temps = 2 * tb * seq_p * hsize_p * 4 + tb * seq_p * isize_p * 4 + 2 * tb * seq_p * 4
    return in2 + small_io + weights + temps


def _choose_batch_tile(B, seq_p, isize_p, hsize_p, in_itemsize, target_rows=1024):
    # Target ~1024 matmul rows per step (amortizes ~0.35us step overhead, fills the
    # 256-wide MXU), clamped by the VMEM budget.
    tb = max(1, target_rows // max(seq_p, 1))
    tb = max(_SUBLANE, (tb // _SUBLANE) * _SUBLANE)
    while tb > _SUBLANE and _step_vmem_bytes(tb, seq_p, isize_p, hsize_p,
                                             in_itemsize) > _VMEM_BUDGET_BYTES:
        tb -= _SUBLANE
    # Don't let the grid collapse toward a single step: >=2 steps keeps v7x's
    # second TensorCore busy and keeps DMA/compute pipelining alive.
    tb = min(tb, max(_SUBLANE, _round_up((B + 1) // 2, _SUBLANE)))
    return tb


def attn_combiner(input1, input2, mask, w1, b1, w2, b2, *,
                  block_b=None, compute_dtype=jnp.bfloat16):
    """input1: (B, 1, isize), input2: (B, S, isize), mask: (B, S, 1) (1.0 == masked).

    w1: (2*isize, hsize), b1: (hsize,), w2: (hsize,), b2: (1,).
    """
    B, S, isize = input2.shape
    two_isize, hsize = w1.shape
    assert two_isize == 2 * isize

    isize_p = _round_up(isize, _LANE)
    hsize_p = _round_up(hsize, _LANE)
    seq_p = _round_up(S, _SUBLANE)
    in_itemsize = jnp.dtype(compute_dtype).itemsize

    if block_b is None:
        tb = _choose_batch_tile(B, seq_p, isize_p, hsize_p, in_itemsize)
    else:
        tb = max(_SUBLANE, (min(block_b, B) // _SUBLANE) * _SUBLANE)  # keep sublane-aligned
    n_steps = max(2, pl.cdiv(B, tb))
    b_pad = n_steps * tb

    f32 = jnp.float32

    # Wrapper-side layout plumbing: lane-pad isize/hsize, sublane-pad S, pad the
    # batch to a whole number of tiles.  All padded rows/positions are fully masked.
    in1_2d = jnp.pad(input1.reshape(B, isize).astype(f32),
                     ((0, b_pad - B), (0, isize_p - isize)))
    in2_3d = jnp.pad(input2.astype(compute_dtype),
                     ((0, b_pad - B), (0, seq_p - S), (0, isize_p - isize)))
    in2_2d = in2_3d.reshape(b_pad * seq_p, isize_p)
    msk_2d = jnp.pad(mask.reshape(B, S).astype(f32),
                     ((0, b_pad - B), (0, seq_p - S)), constant_values=1.0)

    # Split W1 so the broadcast-input1 half of the concat never hits the big matmul.
    w1f = w1.astype(f32)
    w1a = jnp.pad(w1f[:isize], ((0, isize_p - isize), (0, hsize_p - hsize)))
    w1b = jnp.pad(w1f[isize:], ((0, isize_p - isize),
                                (0, hsize_p - hsize))).astype(compute_dtype)
    b1_p = jnp.pad(b1.astype(f32), (0, hsize_p - hsize))
    w2_p = jnp.pad(w2.reshape(-1).astype(f32), (0, hsize_p - hsize)).reshape(1, hsize_p)
    b2_p = b2.reshape(1, 1).astype(f32)

    # Hoisted rank-1 half of the fused Linear: one plain XLA matmul over all rows.
    h1_pre = in1_2d @ w1a + b1_p[None, :]                 # (b_pad, hsize_p) f32

    grid_spec = pltpu.PrefetchScalarGridSpec(
        num_scalar_prefetch=0,
        grid=(n_steps,),
        in_specs=[
            pl.BlockSpec((tb, isize_p),         lambda i: (i, 0)),  # input1
            pl.BlockSpec((tb * seq_p, isize_p), lambda i: (i, 0)),  # input2 (flattened)
            pl.BlockSpec((tb, hsize_p),         lambda i: (i, 0)),  # input1 @ W1a + b1
            pl.BlockSpec((tb, seq_p),           lambda i: (i, 0)),  # mask (dense, batch-blocked)
            pl.BlockSpec((isize_p, hsize_p),    lambda i: (0, 0)),  # W1b
            pl.BlockSpec((1, hsize_p),          lambda i: (0, 0)),  # Scorer weight
            pl.BlockSpec((1, 1),                lambda i: (0, 0)),  # Scorer bias
        ],
        out_specs=pl.BlockSpec((tb, isize_p), lambda i: (i, 0)),    # lane-dense output
    )

    flops = (2 * b_pad * seq_p * isize_p * hsize_p
             + 4 * b_pad * seq_p * hsize_p
             + 4 * b_pad * seq_p * isize_p)
    transcendentals = b_pad * seq_p * (hsize_p + 1) + b_pad
    bytes_accessed = (in2_2d.size * in_itemsize
                      + (in1_2d.size + h1_pre.size + msk_2d.size) * 4
                      + n_steps * (w1b.size * in_itemsize + w2_p.size * 4 + 4)
                      + b_pad * isize_p * 4)
    cost = pl.CostEstimate(flops=int(flops),
                           transcendentals=int(transcendentals),
                           bytes_accessed=int(bytes_accessed))

    out = pl.pallas_call(
        _attn_combiner_kernel,
        out_shape=jax.ShapeDtypeStruct((b_pad, isize_p), input1.dtype),
        grid_spec=grid_spec,
        compiler_params=pltpu.CompilerParams(
            dimension_semantics=("parallel",),        # independent batch tiles
            vmem_limit_bytes=_VMEM_LIMIT_BYTES,
        ),
        cost_estimate=cost,
    )(in1_2d, in2_2d, h1_pre, msk_2d, w1b, w2_p, b2_p)

    return out[:B, :isize].reshape(B, 1, isize)


def attn_combiner_ref(input1, input2, mask, w1, b1, w2, b2):
    """Plain-JAX reference (mirrors the PyTorch forward)."""
    B, S, isize = input2.shape
    x = jnp.concatenate([jnp.broadcast_to(input1, input2.shape), input2], axis=-1)
    h = jax.nn.sigmoid(x @ w1 + b1)
    scores = jax.nn.sigmoid(h @ w2.reshape(-1, 1) + b2)
    tm = jnp.sum(mask, axis=-2, keepdims=True)
    nele = jnp.where(tm == float(S), 1.0, float(S) - tm)
    scores = scores / nele
    scores = jnp.where(mask > 0, 0.0, scores)
    out = jnp.einsum("bsq,bsd->bqd", scores, input2) \
        + (1.0 - jnp.sum(scores, axis=-2, keepdims=True)) * input1
    return out


if __name__ == "__main__":
    B, S, isize = 2, 8, 32
    hsize = isize * 4

    key = jax.random.PRNGKey(0)
    k1, k2, k3, k4, k5, k6 = jax.random.split(key, 6)

    input1 = jax.random.normal(k1, (B, 1, isize), dtype=jnp.float32)
    input2 = jax.random.normal(k2, (B, S, isize), dtype=jnp.float32)

    # deterministic mask: batch 0 has last 3 positions masked, batch 1 unmasked
    lengths = jnp.array([5, 8], dtype=jnp.int32)
    pos = jnp.arange(S)[None, :, None]                          # (1, S, 1)
    mask = (pos >= lengths[:, None, None]).astype(jnp.float32)  # (B, S, 1), 1.0 = masked

    # deterministic parameter init (Linear(2*isize, hsize), Scorer(hsize))
    w1 = jax.random.normal(k3, (2 * isize, hsize), dtype=jnp.float32) * 0.05
    b1 = jax.random.normal(k4, (hsize,), dtype=jnp.float32) * 0.05
    w2 = jax.random.normal(k5, (hsize,), dtype=jnp.float32) * 0.05
    b2 = jax.random.normal(k6, (1,), dtype=jnp.float32) * 0.05

    ref = attn_combiner_ref(input1, input2, mask, w1, b1, w2, b2)

    # f32 compute path (tight tolerance; only approx-reciprocal / summation order differ)
    out_f32 = attn_combiner(input1, input2, mask, w1, b1, w2, b2,
                            compute_dtype=jnp.float32)
    # bf16 compute path (default; mixed-precision tolerance)
    out_bf16 = attn_combiner(input1, input2, mask, w1, b1, w2, b2,
                             compute_dtype=jnp.bfloat16)
    out_f32, out_bf16 = jax.block_until_ready((out_f32, out_bf16))

    assert out_f32.shape == (B, 1, isize)
    assert out_bf16.shape == (B, 1, isize)
    assert jnp.allclose(out_f32, ref, atol=2e-3, rtol=2e-3), "f32 mismatch vs reference"
    assert jnp.allclose(out_bf16, ref, atol=3e-2, rtol=3e-2), "bf16 mismatch vs reference"

    print("KERNEL_OK")
</pallas_src>

<mosaic_0001>
module attributes {stable_mosaic.version = 11 : i64} {
  func.func @_attn_combiner_kernel(%arg0: i32, %arg1: memref<8x128xf32, #tpu.memory_space<vmem>>, %arg2: memref<64x128xf32, #tpu.memory_space<vmem>>, %arg3: memref<8x128xf32, #tpu.memory_space<vmem>>, %arg4: memref<8x8xf32, #tpu.memory_space<vmem>>, %arg5: memref<128x128xf32, #tpu.memory_space<vmem>>, %arg6: memref<1x128xf32, #tpu.memory_space<vmem>>, %arg7: memref<1x1xf32, #tpu.memory_space<vmem>>, %arg8: memref<8x128xf32, #tpu.memory_space<vmem>>) attributes {dimension_semantics = [#tpu.dimension_semantics<parallel>], iteration_bounds = array<i64: 2>, scalar_prefetch = 0 : i64, scratch_operands = 0 : i64, tpu.core_type = #tpu.core_type<tc>, window_params = [{transform_indices = @transform_0, window_bounds = array<i64: 8, 128>}, {transform_indices = @transform_1, window_bounds = array<i64: 64, 128>}, {transform_indices = @transform_2, window_bounds = array<i64: 8, 128>}, {transform_indices = @transform_3, window_bounds = array<i64: 8, 8>}, {pipeline_mode = #tpu.pipeline_mode<synchronous>, transform_indices = @transform_4, window_bounds = array<i64: 128, 128>}, {pipeline_mode = #tpu.pipeline_mode<synchronous>, transform_indices = @transform_5, window_bounds = array<i64: 1, 128>}, {pipeline_mode = #tpu.pipeline_mode<synchronous>, transform_indices = @transform_6, window_bounds = array<i64: 1, 1>}, {transform_indices = @transform_7, window_bounds = array<i64: 8, 128>}]} {
    %c0 = arith.constant 0 : index
    %c0_0 = arith.constant 0 : index
    %0 = vector.load %arg1[%c0, %c0_0] : memref<8x128xf32, #tpu.memory_space<vmem>>, vector<8x128xf32>
    %c0_1 = arith.constant 0 : index
    %c0_2 = arith.constant 0 : index
    %1 = vector.load %arg2[%c0_1, %c0_2] : memref<64x128xf32, #tpu.memory_space<vmem>>, vector<64x128xf32>
    %c0_3 = arith.constant 0 : index
    %c0_4 = arith.constant 0 : index
    %2 = vector.load %arg4[%c0_3, %c0_4] : memref<8x8xf32, #tpu.memory_space<vmem>>, vector<8x8xf32>
    %c0_5 = arith.constant 0 : index
    %c0_6 = arith.constant 0 : index
    %3 = vector.load %arg5[%c0_5, %c0_6] : memref<128x128xf32, #tpu.memory_space<vmem>>, vector<128x128xf32>
    %cst = arith.constant dense<0.000000e+00> : vector<64x128xf32>
    %4 = tpu.matmul %1, %3, %cst {dimension_numbers = #tpu.dot_dimension_numbers<[1], [0], [0], [1], [0, 0, 1, 1], [], []>} : vector<64x128xf32>, vector<128x128xf32>, vector<64x128xf32> -> vector<64x128xf32>
    %5 = vector.shape_cast %4 : vector<64x128xf32> to vector<8x8x128xf32>
    %c0_7 = arith.constant 0 : index
    %c0_8 = arith.constant 0 : index
    %6 = vector.load %arg3[%c0_7, %c0_8] : memref<8x128xf32, #tpu.memory_space<vmem>>, vector<8x128xf32>
    %7 = vector.shape_cast %6 : vector<8x128xf32> to vector<8x1x128xf32>
    %8 = vector.broadcast %7 : vector<8x1x128xf32> to vector<8x8x128xf32>
    %9 = arith.addf %5, %8 : vector<8x8x128xf32>
    %10 = arith.negf %9 : vector<8x8x128xf32>
    %11 = math.exp %10 : vector<8x8x128xf32>
    %cst_9 = arith.constant 1.000000e+00 : f32
    %12 = vector.broadcast %cst_9 : f32 to vector<8x8x128xf32>
    %13 = arith.addf %12, %11 : vector<8x8x128xf32>
    %14 = arith.divf %12, %13 : vector<8x8x128xf32>
    %c0_10 = arith.constant 0 : index
    %c0_11 = arith.constant 0 : index
    %15 = vector.load %arg6[%c0_10, %c0_11] : memref<1x128xf32, #tpu.memory_space<vmem>>, vector<1x128xf32>
    %16 = vector.shape_cast %15 : vector<1x128xf32> to vector<1x1x128xf32>
    %17 = vector.broadcast %16 : vector<1x1x128xf32> to vector<8x8x128xf32>
    %18 = arith.mulf %14, %17 : vector<8x8x128xf32>
    %cst_12 = arith.constant dense<0.000000e+00> : vector<8x8xf32>
    %19 = vector.multi_reduction <add>, %18, %cst_12 [2] : vector<8x8x128xf32> to vector<8x8xf32>
    %c0_13 = arith.constant 0 : index
    %c0_14 = arith.constant 0 : index
    %20 = vector.load %arg7[%c0_13, %c0_14] : memref<1x1xf32, #tpu.memory_space<vmem>>, vector<1x1xf32>
    %21 = vector.broadcast %20 : vector<1x1xf32> to vector<8x8xf32>
    %22 = arith.addf %19, %21 : vector<8x8xf32>
    %23 = arith.negf %22 : vector<8x8xf32>
    %24 = math.exp %23 : vector<8x8xf32>
    %cst_15 = arith.constant 1.000000e+00 : f32
    %25 = vector.broadcast %cst_15 : f32 to vector<8x8xf32>
    %26 = arith.addf %25, %24 : vector<8x8xf32>
    %27 = arith.divf %25, %26 : vector<8x8xf32>
    %cst_16 = arith.constant dense<0.000000e+00> : vector<8xf32>
    %28 = vector.multi_reduction <add>, %2, %cst_16 [1] : vector<8x8xf32> to vector<8xf32>
    %29 = vector.shape_cast %28 : vector<8xf32> to vector<8x1xf32>
    %cst_17 = arith.constant 8.000000e+00 : f32
    %30 = vector.broadcast %cst_17 : f32 to vector<8x1xf32>
    %31 = arith.subf %30, %29 : vector<8x1xf32>
    %cst_18 = arith.constant 1.000000e+00 : f32
    %32 = vector.broadcast %cst_18 : f32 to vector<8x1xf32>
    %33 = arith.maximumf %31, %32 : vector<8x1xf32>
    %34 = tpu.reciprocal %33 {approx = true} : vector<8x1xf32> -> vector<8x1xf32>
    %35 = vector.broadcast %34 : vector<8x1xf32> to vector<8x8xf32>
    %36 = arith.mulf %27, %35 : vector<8x8xf32>
    %cst_19 = arith.constant 0.000000e+00 : f32
    %37 = vector.broadcast %cst_19 : f32 to vector<8x8xf32>
    %38 = arith.cmpf ogt, %2, %37 : vector<8x8xf32>
    %cst_20 = arith.constant 0.000000e+00 : f32
    %39 = vector.broadcast %cst_20 : f32 to vector<8x8xf32>
    %40 = arith.select %38, %39, %36 : vector<8x8xi1>, vector<8x8xf32>
    %41 = vector.shape_cast %1 : vector<64x128xf32> to vector<8x8x128xf32>
    %42 = vector.shape_cast %40 : vector<8x8xf32> to vector<8x8x1xf32>
    %43 = vector.broadcast %42 : vector<8x8x1xf32> to vector<8x8x128xf32>
    %44 = arith.mulf %43, %41 : vector<8x8x128xf32>
    %cst_21 = arith.constant dense<0.000000e+00> : vector<8x128xf32>
    %45 = vector.multi_reduction <add>, %44, %cst_21 [1] : vector<8x8x128xf32> to vector<8x128xf32>
    %cst_22 = arith.constant dense<0.000000e+00> : vector<8xf32>
    %46 = vector.multi_reduction <add>, %40, %cst_22 [1] : vector<8x8xf32> to vector<8xf32>
    %47 = vector.shape_cast %46 : vector<8xf32> to vector<8x1xf32>
    %cst_23 = arith.constant 1.000000e+00 : f32
    %48 = vector.broadcast %cst_23 : f32 to vector<8x1xf32>
    %49 = arith.subf %48, %47 : vector<8x1xf32>
    %50 = vector.broadcast %49 : vector<8x1xf32> to vector<8x128xf32>
    %51 = arith.mulf %50, %0 : vector<8x128xf32>
    %52 = arith.addf %45, %51 : vector<8x128xf32>
    %c0_24 = arith.constant 0 : index
    %c0_25 = arith.constant 0 : index
    %53 = vector.load %arg8[%c0_24, %c0_25] : memref<8x128xf32, #tpu.memory_space<vmem>>, vector<8x128xf32>
    tpu.vector_store %arg8[%c0_24, %c0_25], %52 {strides = array<i32>} : memref<8x128xf32, #tpu.memory_space<vmem>>, vector<8x128xf32>,
    return
  }
  func.func @transform_0(%arg0: i32) -> (i32, i32) {
    %c0_i32 = arith.constant 0 : i32
    %c0_i32_0 = arith.constant 0 : i32
    return %arg0, %c0_i32 : i32, i32
  }
  func.func @transform_1(%arg0: i32) -> (i32, i32) {
    %c0_i32 = arith.constant 0 : i32
    %c0_i32_0 = arith.constant 0 : i32
    return %arg0, %c0_i32 : i32, i32
  }
  func.func @transform_2(%arg0: i32) -> (i32, i32) {
    %c0_i32 = arith.constant 0 : i32
    %c0_i32_0 = arith.constant 0 : i32
    return %arg0, %c0_i32 : i32, i32
  }
  func.func @transform_3(%arg0: i32) -> (i32, i32) {
    %c0_i32 = arith.constant 0 : i32
    %c0_i32_0 = arith.constant 0 : i32
    return %arg0, %c0_i32 : i32, i32
  }
  func.func @transform_4(%arg0: i32) -> (i32, i32) {
    %c0_i32 = arith.constant 0 : i32
    %c0_i32_0 = arith.constant 0 : i32
    %c0_i32_1 = arith.constant 0 : i32
    return %c0_i32, %c0_i32_0 : i32, i32
  }
  func.func @transform_5(%arg0: i32) -> (i32, i32) {
    %c0_i32 = arith.constant 0 : i32
    %c0_i32_0 = arith.constant 0 : i32
    %c0_i32_1 = arith.constant 0 : i32
    return %c0_i32, %c0_i32_0 : i32, i32
  }
  func.func @transform_6(%arg0: i32) -> (i32, i32) {
    %c0_i32 = arith.constant 0 : i32
    %c0_i32_0 = arith.constant 0 : i32
    %c0_i32_1 = arith.constant 0 : i32
    return %c0_i32, %c0_i32_0 : i32, i32
  }
  func.func @transform_7(%arg0: i32) -> (i32, i32) {
    %c0_i32 = arith.constant 0 : i32
    %c0_i32_0 = arith.constant 0 : i32
    return %arg0, %c0_i32 : i32, i32
  }
}

</mosaic_0001>

<llo_original>
// kernel: tpu_custom_call.1
$region0: #{tpu_custom_call.1}
  #allocation0 [shape = 'u32[]', space=smem, size = 0x4, offset = 0x4, fixed_abs, tag = 'smem constant byte address 0x4 - core index']
  #allocation1 [shape = 'u32[144,128]{1,0:T(1,128)}', space=vmem, size = 0x12000, scoped, tag = 'internal scratch']
  #allocation2 [shape = 'f32[1,1]{1,0:T(1,128)S(1)}', space=vmem, size = 0x200, scoped, tag = 'scoped memory for tpu_custom_call.1']
  %s0 = inlined_call_operand.hbm [shape: f32[16,128], index: 0, kind: input, shape index: {}]
  %s1 = inlined_call_operand.hbm [shape: f32[128,128], index: 1, kind: input, shape index: {}]
  %s2 = inlined_call_operand.hbm [shape: f32[16,128], index: 2, kind: input, shape index: {}]
  %s3 = inlined_call_operand.hbm [shape: f32[16,8], index: 3, kind: input, shape index: {}]
  %s4 = inlined_call_operand.hbm [shape: f32[128,128], index: 4, kind: input, shape index: {}]
  %s5 = inlined_call_operand.hbm [shape: f32[1,128], index: 5, kind: input, shape index: {}]
  %s6 = inlined_call_operand.<no memory space> [shape: f32[1,1], index: 6, kind: input, shape index: {}]
  %s7 = inlined_call_operand.hbm [shape: f32[16,128], index: 7, kind: output, shape index: {}]
  %s8 = sld [smem:[#allocation0]]
  $region85: #{tpu_custom_call.1} parent=0
    _
  %s10 = ssub.s32 1, %s8
  %s11 = scalar_select 0, %s10, %s8
  %v12 = vstv %s6
  %13 = vst [vmem:[#allocation2] sm:$0x1] %v12
  $region1: #{tpu_custom_call.1} parent=0
    #allocation3 [shape = 'u8[8192]{0}', space=vmem, size = 0x2000, scoped, tag = 'input window, operand 0']
    #allocation4 [shape = 's32[2]{0}', space=sflag, size = 0x8, scoped, tag = 'scoped memory for tpu_custom_call.1']
    #allocation5 [shape = 's32[2]{0}', space=sflag, size = 0x8, scoped, tag = 'scoped memory for tpu_custom_call.1']
    #allocation6 [shape = 'u8[65536]{0}', space=vmem, size = 0x10000, scoped, tag = 'input window, operand 1']
    #allocation7 [shape = 's32[2]{0}', space=sflag, size = 0x8, scoped, tag = 'scoped memory for tpu_custom_call.1']
    #allocation8 [shape = 'u8[8192]{0}', space=vmem, size = 0x2000, scoped, tag = 'input window, operand 2']
    #allocation9 [shape = 'u8[8192]{0}', space=vmem, size = 0x2000, scoped, tag = 'input window, operand 3']
    #allocation10 [shape = 's32[2]{0}', space=sflag, size = 0x8, scoped, tag = 'scoped memory for tpu_custom_call.1']
    #allocation11 [shape = 'u8[65536]{0}', space=vmem, size = 0x10000, scoped, tag = 'input window, operand 4, single buffered']
    #allocation12 [shape = 'u8[512]{0}', space=vmem, size = 0x400, scoped, tag = 'input window, operand 5, single buffered']
    #allocation13 [shape = 's32[1]{0}', space=sflag, size = 0x4, scoped, tag = 'scoped memory for tpu_custom_call.1']
    #allocation14 [shape = 'u8[8192]{0}', space=vmem, size = 0x2000, scoped, tag = 'output window, operand 0']
    %14 = vsyncpa [#allocation4], 0
    %s15 = scalar_lea.sflag [#allocation4], 1
    %16 = vsyncpa %s15, 0
    %17 = vsyncpa [#allocation7], 0
    %s18 = scalar_lea.sflag [#allocation7], 1
    %19 = vsyncpa %s18, 0
    %20 = vsyncpa [#allocation10], 0
    %s21 = scalar_lea.sflag [#allocation10], 1
    %22 = vsyncpa %s21, 0
    %23 = vsyncpa [#allocation13], 0
    %24 = vsyncpa [#allocation5], 0
    %s25 = scalar_lea.sflag [#allocation5], 1
    %26 = vsyncpa %s25, 0
    loop: start=0, step=1, limit=4
    $region2: #{tpu_custom_call.1} parent=1 // loop_pre_header
      _
    $region3: #{tpu_custom_call.1} parent=1 // loop_header
      %s28 = sphi 0, %s32
      %p29 = scmp.ge.s32.totalorder %s28, 4
      %s38 = sphi 0, %s40
      %s41 = sphi 0, %s38
      %s42 = sphi 0, %s41
      %s58 = sphi 0, %s42
      %s64 = sphi 0, %s66
      %s67 = sphi 0, %s64
      %s68 = sphi 0, %s67
      %s84 = sphi 0, %s68
      %s90 = sphi 0, %s92
      %s93 = sphi 0, %s90
      %s94 = sphi 0, %s93
      %s110 = sphi 0, %s94
      %s116 = sphi 0, %s118
      %s119 = sphi 0, %s116
      %s120 = sphi 0, %s119
      %s136 = sphi 0, %s120
      %s140 = sphi 0, %s140
      %s142 = sphi 0, %s140
      %s143 = sphi 0, %s142
      %s157 = sphi 0, %s143
      %s161 = sphi 0, %s161
      %s163 = sphi 0, %s161
      %s164 = sphi 0, %s163
      %s178 = sphi 0, %s164
      %s182 = sphi 0, %s182
      %s184 = sphi 0, %s182
      %s185 = sphi 0, %s184
      %s199 = sphi 0, %s185
      %s205 = sphi 0, %s207
      %s208 = sphi 0, %s205
      %s209 = sphi 0, %s208
      %s225 = sphi 0, %s209
    $region4: #{tpu_custom_call.1} parent=1 // loop_header_branch
      %31 = sbr.rel (%p29) target = $region8
    $region5: #{tpu_custom_call.1} parent=1 // loop_body
      %s33 = ssub.s32 %s28, 1
      %s34 = ssub.s32 %s28, 2
      %s35 = sadd.s32 %s28, 1
      %s36 = ssub.s32 %s28, %s35
      %p37 = scmp.eq.s32.totalorder %s36, 0
      %s39 = sadd.s32 %s38, 1
      %s40 = scalar_select %p37, %s38, %s39
      %p43 = pneg %p37
      %p44 = scmp.eq.s32.totalorder %s28, 1
      %p45 = por %p43, %p44
      %p46 = scmp.ne.s32.totalorder %s38, %s41
      %p47 = scmp.eq.s32.totalorder %s28, 0
      %p48 = por %p46, %p47
      %p49 = scmp.ne.s32.totalorder %s38, %s41
      %p50 = scmp.eq.s32.totalorder %s33, 1
      %p51 = por %p49, %p50
      %p52 = scmp.ne.s32.totalorder %s41, %s42
      %p53 = scmp.eq.s32.totalorder %s33, 0
      %p54 = por %p52, %p53
      %p55 = scmp.ne.s32.totalorder %s41, %s42
      %p56 = scmp.eq.s32.totalorder %s34, 1
      %p57 = por %p55, %p56
      %p59 = scmp.ne.s32.totalorder %s42, %s58
      %p60 = scmp.eq.s32.totalorder %s34, 0
      %p61 = por %p59, %p60
      %s62 = ssub.s32 %s28, %s35
      %p63 = scmp.eq.s32.totalorder %s62, 0
      %s65 = sadd.s32 %s64, 1
      %s66 = scalar_select %p63, %s64, %s65
      %p69 = pneg %p63
      %p70 = scmp.eq.s32.totalorder %s28, 1
      %p71 = por %p69, %p70
      %p72 = scmp.ne.s32.totalorder %s64, %s67
      %p73 = scmp.eq.s32.totalorder %s28, 0
      %p74 = por %p72, %p73
      %p75 = scmp.ne.s32.totalorder %s64, %s67
      %p76 = scmp.eq.s32.totalorder %s33, 1
      %p77 = por %p75, %p76
      %p78 = scmp.ne.s32.totalorder %s67, %s68
      %p79 = scmp.eq.s32.totalorder %s33, 0
      %p80 = por %p78, %p79
      %p81 = scmp.ne.s32.totalorder %s67, %s68
      %p82 = scmp.eq.s32.totalorder %s34, 1
      %p83 = por %p81, %p82
      %p85 = scmp.ne.s32.totalorder %s68, %s84
      %p86 = scmp.eq.s32.totalorder %s34, 0
      %p87 = por %p85, %p86
      %s88 = ssub.s32 %s28, %s35
      %p89 = scmp.eq.s32.totalorder %s88, 0
      %s91 = sadd.s32 %s90, 1
      %s92 = scalar_select %p89, %s90, %s91
      %p95 = pneg %p89
      %p96 = scmp.eq.s32.totalorder %s28, 1
      %p97 = por %p95, %p96
      %p98 = scmp.ne.s32.totalorder %s90, %s93
      %p99 = scmp.eq.s32.totalorder %s28, 0
      %p100 = por %p98, %p99
      %p101 = scmp.ne.s32.totalorder %s90, %s93
      %p102 = scmp.eq.s32.totalorder %s33, 1
      %p103 = por %p101, %p102
      %p104 = scmp.ne.s32.totalorder %s93, %s94
      %p105 = scmp.eq.s32.totalorder %s33, 0
      %p106 = por %p104, %p105
      %p107 = scmp.ne.s32.totalorder %s93, %s94
      %p108 = scmp.eq.s32.totalorder %s34, 1
      %p109 = por %p107, %p108
      %p111 = scmp.ne.s32.totalorder %s94, %s110
      %p112 = scmp.eq.s32.totalorder %s34, 0
      %p113 = por %p111, %p112
      %s114 = ssub.s32 %s28, %s35
      %p115 = scmp.eq.s32.totalorder %s114, 0
      %s117 = sadd.s32 %s116, 1
      %s118 = scalar_select %p115, %s116, %s117
      %p121 = pneg %p115
      %p122 = scmp.eq.s32.totalorder %s28, 1
      %p123 = por %p121, %p122
      %p124 = scmp.ne.s32.totalorder %s116, %s119
      %p125 = scmp.eq.s32.totalorder %s28, 0
      %p126 = por %p124, %p125
      %p127 = scmp.ne.s32.totalorder %s116, %s119
      %p128 = scmp.eq.s32.totalorder %s33, 1
      %p129 = por %p127, %p128
      %p130 = scmp.ne.s32.totalorder %s119, %s120
      %p131 = scmp.eq.s32.totalorder %s33, 0
      %p132 = por %p130, %p131
      %p133 = scmp.ne.s32.totalorder %s119, %s120
      %p134 = scmp.eq.s32.totalorder %s34, 1
      %p135 = por %p133, %p134
      %p137 = scmp.ne.s32.totalorder %s120, %s136
      %p138 = scmp.eq.s32.totalorder %s34, 0
      %p139 = por %p137, %p138
      %s141 = sadd.s32 %s140, 1
      %p144 = scmp.eq.s32.totalorder %s28, 1
      %p145 = scmp.ne.s32.totalorder %s140, %s142
      %p146 = scmp.eq.s32.totalorder %s28, 0
      %p147 = por %p145, %p146
      %p148 = scmp.ne.s32.totalorder %s140, %s142
      %p149 = scmp.eq.s32.totalorder %s33, 1
      %p150 = por %p148, %p149
      %p151 = scmp.ne.s32.totalorder %s142, %s143
      %p152 = scmp.eq.s32.totalorder %s33, 0
      %p153 = por %p151, %p152
      %p154 = scmp.ne.s32.totalorder %s142, %s143
      %p155 = scmp.eq.s32.totalorder %s34, 1
      %p156 = por %p154, %p155
      %p158 = scmp.ne.s32.totalorder %s143, %s157
      %p159 = scmp.eq.s32.totalorder %s34, 0
      %p160 = por %p158, %p159
      %s162 = sadd.s32 %s161, 1
      %p165 = scmp.eq.s32.totalorder %s28, 1
      %p166 = scmp.ne.s32.totalorder %s161, %s163
      %p167 = scmp.eq.s32.totalorder %s28, 0
      %p168 = por %p166, %p167
      %p169 = scmp.ne.s32.totalorder %s161, %s163
      %p170 = scmp.eq.s32.totalorder %s33, 1
      %p171 = por %p169, %p170
      %p172 = scmp.ne.s32.totalorder %s163, %s164
      %p173 = scmp.eq.s32.totalorder %s33, 0
      %p174 = por %p172, %p173
      %p175 = scmp.ne.s32.totalorder %s163, %s164
      %p176 = scmp.eq.s32.totalorder %s34, 1
      %p177 = por %p175, %p176
      %p179 = scmp.ne.s32.totalorder %s164, %s178
      %p180 = scmp.eq.s32.totalorder %s34, 0
      %p181 = por %p179, %p180
      %s183 = sadd.s32 %s182, 1
      %p186 = scmp.eq.s32.totalorder %s28, 1
      %p187 = scmp.ne.s32.totalorder %s182, %s184
      %p188 = scmp.eq.s32.totalorder %s28, 0
      %p189 = por %p187, %p188
      %p190 = scmp.ne.s32.totalorder %s182, %s184
      %p191 = scmp.eq.s32.totalorder %s33, 1
      %p192 = por %p190, %p191
      %p193 = scmp.ne.s32.totalorder %s184, %s185
      %p194 = scmp.eq.s32.totalorder %s33, 0
      %p195 = por %p193, %p194
      %p196 = scmp.ne.s32.totalorder %s184, %s185
      %p197 = scmp.eq.s32.totalorder %s34, 1
      %p198 = por %p196, %p197
      %p200 = scmp.ne.s32.totalorder %s185, %s199
      %p201 = scmp.eq.s32.totalorder %s34, 0
      %p202 = por %p200, %p201
      %s203 = ssub.s32 %s28, %s35
      %p204 = scmp.eq.s32.totalorder %s203, 0
      %s206 = sadd.s32 %s205, 1
      %s207 = scalar_select %p204, %s205, %s206
      %p210 = pneg %p204
      %p211 = scmp.eq.s32.totalorder %s28, 1
      %p212 = por %p210, %p211
      %p213 = scmp.ne.s32.totalorder %s205, %s208
      %p214 = scmp.eq.s32.totalorder %s28, 0
      %p215 = por %p213, %p214
      %p216 = scmp.ne.s32.totalorder %s205, %s208
      %p217 = scmp.eq.s32.totalorder %s33, 1
      %p218 = por %p216, %p217
      %p219 = scmp.ne.s32.totalorder %s208, %s209
      %p220 = scmp.eq.s32.totalorder %s33, 0
      %p221 = por %p219, %p220
      %p222 = scmp.ne.s32.totalorder %s208, %s209
      %p223 = scmp.eq.s32.totalorder %s34, 1
      %p224 = por %p222, %p223
      %p226 = scmp.ne.s32.totalorder %s209, %s225
      %p227 = scmp.eq.s32.totalorder %s34, 0
      %p228 = por %p226, %p227
      %p229 = scmp.le.s32.totalorder 1, %s28
      %p230 = scmp.lt.s32.totalorder %s28, 3
      %p231 = pnand %p229, %p230
      %p232 = pneg %p231
      // Predicated region
      $region9: #{tpu_custom_call.1} parent=5 // pred_check
        _
      $region10: #{tpu_custom_call.1} parent=5 // pred_check_branch
        %234 = sbr.rel (%p231) target = $region12
      $region11: #{tpu_custom_call.1} parent=5 // pred_region
        %s235 = ssub.s32 %s28, 1
        // Predicated region
        $region13: #{tpu_custom_call.1} parent=11 // pred_check
          %p236 = pneg %p153
        $region14: #{tpu_custom_call.1} parent=11 // pred_check_branch
          %238 = sbr.rel (%p236) target = $region16
        $region15: #{tpu_custom_call.1} parent=11 // pred_region
          %s240 = ssub.s32 2048, 2048
          %241 = vsyncadd [#allocation10], %s240
          %s242 = sshll.u32 [#allocation11], 4
          %s243 = int_to_ptr.vmem [resolvable:$true] %s242
          %248 = dma.hbm_to_vmem [thread:$0]  %s4, 2048, %s243, [#allocation10], 128, 128, 8
        $region16: #{tpu_custom_call.1} parent=11 // pred_fallthru
          _
        // Predicated region
        $region17: #{tpu_custom_call.1} parent=11 // pred_check
          %p249 = pneg %p174
        $region18: #{tpu_custom_call.1} parent=11 // pred_check_branch
          %251 = sbr.rel (%p249) target = $region20
        $region19: #{tpu_custom_call.1} parent=11 // pred_region
          %s253 = ssub.s32 16, 16
          %254 = vsyncadd [#allocation13], %s253
          %s256 = sshll.u32 [#allocation12], 4
          %s257 = int_to_ptr.vmem [resolvable:$true] %s256
          %259 = dma.hbm_to_vmem [thread:$0]  %s5, 16, %s257, [#allocation13]
        $region20: #{tpu_custom_call.1} parent=11 // pred_fallthru
          _
        // Predicated region
        $region21: #{tpu_custom_call.1} parent=11 // pred_check
          %p260 = pneg %p195
        $region22: #{tpu_custom_call.1} parent=11 // pred_check_branch
          %262 = sbr.rel (%p260) target = $region24
        $region23: #{tpu_custom_call.1} parent=11 // pred_region
          _
        $region24: #{tpu_custom_call.1} parent=11 // pred_fallthru
          _
      $region12: #{tpu_custom_call.1} parent=5 // pred_fallthru
        _
      %p263 = scmp.lt.s32.totalorder %s28, 2
      // Predicated region
      $region25: #{tpu_custom_call.1} parent=5 // pred_check
        %p264 = pneg %p263
      $region26: #{tpu_custom_call.1} parent=5 // pred_check_branch
        %266 = sbr.rel (%p264) target = $region28
      $region27: #{tpu_custom_call.1} parent=5 // pred_region
        // Predicated region
        $region29: #{tpu_custom_call.1} parent=27 // pred_check
          %p267 = pneg %p48
        $region30: #{tpu_custom_call.1} parent=27 // pred_check_branch
          %269 = sbr.rel (%p267) target = $region32
        $region31: #{tpu_custom_call.1} parent=27 // pred_region
          %s270 = sand.u32 %s38, 1
          %s271 = scalar_lea.sflag [#allocation4], %s270
          %s272 = sand.u32 %s38, 1
          %s273 = smul.addr %s272, 8
          %s274 = scalar_lea.vmem [#allocation3], %s273
          %s276 = ssub.s32 128, 128
          %277 = vsyncadd %s271, %s276
          %s278 = smul.addr %s28, 128
          %s279 = scalar_lea.hbm %s0, %s278
          %s281 = sshll.u32 %s274, 4
          %s282 = int_to_ptr.vmem [resolvable:$true] %s281
          %284 = dma.hbm_to_vmem [thread:$0]  %s279, 128, %s282, %s271
        $region32: #{tpu_custom_call.1} parent=27 // pred_fallthru
          _
        // Predicated region
        $region33: #{tpu_custom_call.1} parent=27 // pred_check
          %p285 = pneg %p74
        $region34: #{tpu_custom_call.1} parent=27 // pred_check_branch
          %287 = sbr.rel (%p285) target = $region36
        $region35: #{tpu_custom_call.1} parent=27 // pred_region
          %s288 = sand.u32 %s28, 1
          %s289 = scalar_lea.sflag [#allocation7], %s288
          %s290 = sand.u32 %s64, 1
          %s291 = smul.addr %s290, 64
          %s292 = scalar_lea.vmem [#allocation6], %s291
          %s293 = smul.u32 8, %s28
          %s295 = ssub.s32 1024, 1024
          %296 = vsyncadd %s289, %s295
          %s297 = smul.addr %s293, 128
          %s298 = scalar_lea.hbm %s1, %s297
          %s299 = sshll.u32 %s292, 4
          %s300 = int_to_ptr.vmem [resolvable:$true] %s299
          %305 = dma.hbm_to_vmem [thread:$0]  %s298, 1024, %s300, %s289, 128, 128, 8
        $region36: #{tpu_custom_call.1} parent=27 // pred_fallthru
          _
        // Predicated region
        $region37: #{tpu_custom_call.1} parent=27 // pred_check
          %p306 = pneg %p100
        $region38: #{tpu_custom_call.1} parent=27 // pred_check_branch
          %308 = sbr.rel (%p306) target = $region40
        $region39: #{tpu_custom_call.1} parent=27 // pred_region
          %s309 = sand.u32 %s28, 1
          %s310 = scalar_lea.sflag [#allocation7], %s309
          %s311 = sand.u32 %s90, 1
          %s312 = smul.addr %s311, 8
          %s313 = scalar_lea.vmem [#allocation8], %s312
          %s315 = ssub.s32 128, 128
          %316 = vsyncadd %s310, %s315
          %s317 = smul.addr %s28, 128
          %s318 = scalar_lea.hbm %s2, %s317
          %s320 = sshll.u32 %s313, 4
          %s321 = int_to_ptr.vmem [resolvable:$true] %s320
          %323 = dma.hbm_to_vmem [thread:$0]  %s318, 128, %s321, %s310
        $region40: #{tpu_custom_call.1} parent=27 // pred_fallthru
          _
        // Predicated region
        $region41: #{tpu_custom_call.1} parent=27 // pred_check
          %p324 = pneg %p126
        $region42: #{tpu_custom_call.1} parent=27 // pred_check_branch
          %326 = sbr.rel (%p324) target = $region44
        $region43: #{tpu_custom_call.1} parent=27 // pred_region
          %s327 = sand.u32 %s28, 1
          %s328 = scalar_lea.sflag [#allocation10], %s327
          %s329 = sand.u32 %s116, 1
          %s330 = smul.addr %s329, 8
          %s331 = scalar_lea.vmem [#allocation9], %s330
          %s333 = ssub.s32 128, 128
          %334 = vsyncadd %s328, %s333
          %s335 = smul.addr %s28, 128
          %s336 = scalar_lea.hbm %s3, %s335
          %s338 = sshll.u32 %s331, 4
          %s339 = int_to_ptr.vmem [resolvable:$true] %s338
          %341 = dma.hbm_to_vmem [thread:$0]  %s336, 128, %s339, %s328
        $region44: #{tpu_custom_call.1} parent=27 // pred_fallthru
          _
      $region28: #{tpu_custom_call.1} parent=5 // pred_fallthru
        _
      %p342 = scmp.le.s32.totalorder 1, %s28
      %p343 = scmp.lt.s32.totalorder %s28, 3
      %p344 = pnand %p342, %p343
      %p345 = pneg %p344
      // Predicated region
      $region45: #{tpu_custom_call.1} parent=5 // pred_check
        _
      $region46: #{tpu_custom_call.1} parent=5 // pred_check_branch
        %347 = sbr.rel (%p344) target = $region48
      $region47: #{tpu_custom_call.1} parent=5 // pred_region
        %s348 = ssub.s32 %s28, 1
        %s349 = sand.u32 %s41, 1
        %s350 = scalar_lea.sflag [#allocation4], %s349
        %s351 = sand.u32 %s41, 1
        %s352 = smul.addr %s351, 8
        %s353 = scalar_lea.vmem [#allocation3], %s352
        // Predicated region
        $region49: #{tpu_custom_call.1} parent=47 // pred_check
          %p354 = pneg %p54
        $region50: #{tpu_custom_call.1} parent=47 // pred_check_branch
          %356 = sbr.rel (%p354) target = $region52
        $region51: #{tpu_custom_call.1} parent=47 // pred_region
          %357 = dma.done %s350, 128
        $region52: #{tpu_custom_call.1} parent=47 // pred_fallthru
          _
        %s358 = sand.u32 %s33, 1
        %s359 = scalar_lea.sflag [#allocation7], %s358
        %s360 = sand.u32 %s67, 1
        %s361 = smul.addr %s360, 64
        %s362 = scalar_lea.vmem [#allocation6], %s361
        // Predicated region
        $region53: #{tpu_custom_call.1} parent=47 // pred_check
          %p363 = pneg %p80
        $region54: #{tpu_custom_call.1} parent=47 // pred_check_branch
          %365 = sbr.rel (%p363) target = $region56
        $region55: #{tpu_custom_call.1} parent=47 // pred_region
          %366 = dma.done %s359, 1024
        $region56: #{tpu_custom_call.1} parent=47 // pred_fallthru
          _
        %s367 = sand.u32 %s33, 1
        %s368 = scalar_lea.sflag [#allocation7], %s367
        %s369 = sand.u32 %s93, 1
        %s370 = smul.addr %s369, 8
        %s371 = scalar_lea.vmem [#allocation8], %s370
        // Predicated region
        $region57: #{tpu_custom_call.1} parent=47 // pred_check
          %p372 = pneg %p106
        $region58: #{tpu_custom_call.1} parent=47 // pred_check_branch
          %374 = sbr.rel (%p372) target = $region60
        $region59: #{tpu_custom_call.1} parent=47 // pred_region
          %375 = dma.done %s368, 128
        $region60: #{tpu_custom_call.1} parent=47 // pred_fallthru
          _
        %s376 = sand.u32 %s33, 1
        %s377 = scalar_lea.sflag [#allocation10], %s376
        %s378 = sand.u32 %s119, 1
        %s379 = smul.addr %s378, 8
        %s380 = scalar_lea.vmem [#allocation9], %s379
        // Predicated region
        $region61: #{tpu_custom_call.1} parent=47 // pred_check
          %p381 = pneg %p132
        $region62: #{tpu_custom_call.1} parent=47 // pred_check_branch
          %383 = sbr.rel (%p381) target = $region64
        $region63: #{tpu_custom_call.1} parent=47 // pred_region
          %384 = dma.done %s377, 128
        $region64: #{tpu_custom_call.1} parent=47 // pred_fallthru
          _
        // Predicated region
        $region65: #{tpu_custom_call.1} parent=47 // pred_check
          %p385 = pneg %p153
        $region66: #{tpu_custom_call.1} parent=47 // pred_check_branch
          %387 = sbr.rel (%p385) target = $region68
        $region67: #{tpu_custom_call.1} parent=47 // pred_region
          %388 = dma.done [#allocation10], 2048
        $region68: #{tpu_custom_call.1} parent=47 // pred_fallthru
          _
        // Predicated region
        $region69: #{tpu_custom_call.1} parent=47 // pred_check
          %p389 = pneg %p174
        $region70: #{tpu_custom_call.1} parent=47 // pred_check_branch
          %391 = sbr.rel (%p389) target = $region72
        $region71: #{tpu_custom_call.1} parent=47 // pred_region
          %392 = dma.done [#allocation13], 16
        $region72: #{tpu_custom_call.1} parent=47 // pred_fallthru
          _
        %s393 = sand.u32 %s41, 1
        %s394 = scalar_lea.sflag [#allocation4], %s393
        %s395 = sand.u32 %s41, 1
        %s396 = smul.addr %s395, 8
        %s397 = scalar_lea.vmem [#allocation3], %s396
        %p398 = pneg %p54
        %p399 = pneg %p51
        %s400 = sand.u32 %s33, 1
        %s401 = scalar_lea.sflag [#allocation7], %s400
        %s402 = sand.u32 %s67, 1
        %s403 = smul.addr %s402, 64
        %s404 = scalar_lea.vmem [#allocation6], %s403
        %p405 = pneg %p80
        %p406 = pneg %p77
        %s407 = sand.u32 %s33, 1
        %s408 = scalar_lea.sflag [#allocation7], %s407
        %s409 = sand.u32 %s93, 1
        %s410 = smul.addr %s409, 8
        %s411 = scalar_lea.vmem [#allocation8], %s410
        %p412 = pneg %p106
        %p413 = pneg %p103
        %s414 = sand.u32 %s33, 1
        %s415 = scalar_lea.sflag [#allocation10], %s414
        %s416 = sand.u32 %s119, 1
        %s417 = smul.addr %s416, 8
        %s418 = scalar_lea.vmem [#allocation9], %s417
        %p419 = pneg %p132
        %p420 = pneg %p129
        %p421 = pneg %p153
        %p422 = pneg %p150
        %p423 = pneg %p174
        %p424 = pneg %p171
        %p425 = pneg %p195
        %p426 = pneg %p192
        %p427 = pneg %p221
        %p428 = pneg %p218
        %s429 = sand.u32 %s208, 1
        %s430 = scalar_lea.sflag [#allocation5], %s429
        %s431 = sand.u32 %s208, 1
        %s432 = smul.addr %s431, 8
        %s433 = scalar_lea.vmem [#allocation14], %s432
        %s434 = smul.u32 8, %s33
        %v435 = vld [vmem:[%s353] sm:$0xff]
        %v436 = vld [vmem:[%s362] sm:$0xff]
        %v437 = vld [vmem:[%s362 + $0x8] sm:$0xff]
        %v438 = vld [vmem:[%s362 + $0x10] sm:$0xff]
        %v439 = vld [vmem:[%s362 + $0x18] sm:$0xff]
        %v440 = vld [vmem:[%s362 + $0x20] sm:$0xff]
        %v441 = vld [vmem:[%s362 + $0x28] sm:$0xff]
        %v442 = vld [vmem:[%s362 + $0x30] sm:$0xff]
        %v443 = vld [vmem:[%s362 + $0x38] sm:$0xff]
        %v444 = vld [vmem:[%s380] sm:$0xff]
        %v445 = vld [vmem:[#allocation11] sm:$0xff]
        %v446 = vld [vmem:[#allocation11 + $0x8] sm:$0xff]
        %v447 = vld [vmem:[#allocation11 + $0x10] sm:$0xff]
        %v448 = vld [vmem:[#allocation11 + $0x18] sm:$0xff]
        %v449 = vld [vmem:[#allocation11 + $0x20] sm:$0xff]
        %v450 = vld [vmem:[#allocation11 + $0x28] sm:$0xff]
        %v451 = vld [vmem:[#allocation11 + $0x30] sm:$0xff]
        %v452 = vld [vmem:[#allocation11 + $0x38] sm:$0xff]
        %v453 = vld [vmem:[#allocation11 + $0x40] sm:$0xff]
        %v454 = vld [vmem:[#allocation11 + $0x48] sm:$0xff]
        %v455 = vld [vmem:[#allocation11 + $0x50] sm:$0xff]
        %v456 = vld [vmem:[#allocation11 + $0x58] sm:$0xff]
        %v457 = vld [vmem:[#allocation11 + $0x60] sm:$0xff]
        %v458 = vld [vmem:[#allocation11 + $0x68] sm:$0xff]
        %v459 = vld [vmem:[#allocation11 + $0x70] sm:$0xff]
        %v460 = vld [vmem:[#allocation11 + $0x78] sm:$0xff]
        %461 = vmatprep.subr.mxu0 0.0
        %462 = vmatpush1.msra.mxu0 %v445
        %463 = vmatprep.subr.mxu0 0.0
        %464 = vmatpush1.msra.mxu0 %v446
        %465 = vmatprep.subr.mxu0 0.0
        %466 = vmatpush1.msra.mxu0 %v447
        %467 = vmatprep.subr.mxu0 0.0
        %468 = vmatpush1.msra.mxu0 %v448
        %469 = vmatprep.subr.mxu0 0.0
        %470 = vmatpush1.msra.mxu0 %v449
        %471 = vmatprep.subr.mxu0 0.0
        %472 = vmatpush1.msra.mxu0 %v450
        %473 = vmatprep.subr.mxu0 0.0
        %474 = vmatpush1.msra.mxu0 %v451
        %475 = vmatprep.subr.mxu0 0.0
        %476 = vmatpush1.msra.mxu0 %v452
        %477 = vmatprep.subr.mxu0 0.0
        %478 = vmatpush1.msra.mxu0 %v453
        %479 = vmatprep.subr.mxu0 0.0
        %480 = vmatpush1.msra.mxu0 %v454
        %481 = vmatprep.subr.mxu0 0.0
        %482 = vmatpush1.msra.mxu0 %v455
        %483 = vmatprep.subr.mxu0 0.0
        %484 = vmatpush1.msra.mxu0 %v456
        %485 = vmatprep.subr.mxu0 0.0
        %486 = vmatpush1.msra.mxu0 %v457
        %487 = vmatprep.subr.mxu0 0.0
        %488 = vmatpush1.msra.mxu0 %v458
        %489 = vmatprep.subr.mxu0 0.0
        %490 = vmatpush1.msra.mxu0 %v459
        %491 = vmatprep.subr.mxu0 0.0
        %492 = vmatpush1.msra.mxu0 %v460
        %493 = vmatprep.subr.mxu0 0.0
        %494 = vmatpush1.msra.mxu0 0.0
        %495 = vmatprep.subr.mxu0 0.0
        %496 = vmatpush1.msra.mxu0 0.0
        %497 = vmatprep.subr.mxu0 0.0
        %498 = vmatpush1.msra.mxu0 0.0
        %499 = vmatprep.subr.mxu0 0.0
        %500 = vmatpush1.msra.mxu0 0.0
        %501 = vmatprep.subr.mxu0 0.0
        %502 = vmatpush1.msra.mxu0 0.0
        %503 = vmatprep.subr.mxu0 0.0
        %504 = vmatpush1.msra.mxu0 0.0
        %505 = vmatprep.subr.mxu0 0.0
        %506 = vmatpush1.msra.mxu0 0.0
        %507 = vmatprep.subr.mxu0 0.0
        %508 = vmatpush1.msra.mxu0 0.0
        %509 = vmatprep.subr.mxu0 0.0
        %510 = vmatpush1.msra.mxu0 0.0
        %511 = vmatprep.subr.mxu0 0.0
        %512 = vmatpush1.msra.mxu0 0.0
        %513 = vmatprep.subr.mxu0 0.0
        %514 = vmatpush1.msra.mxu0 0.0
        %515 = vmatprep.subr.mxu0 0.0
        %516 = vmatpush1.msra.mxu0 0.0
        %517 = vmatprep.subr.mxu0 0.0
        %518 = vmatpush1.msra.mxu0 0.0
        %519 = vmatprep.subr.mxu0 0.0
        %520 = vmatpush1.msra.mxu0 0.0
        %521 = vmatprep.subr.mxu0 0.0
        %522 = vmatpush1.msra.mxu0 0.0
        %523 = vmatprep.subr.mxu0 0.0
        %524 = vmatpush1.msra.mxu0 0.0
        %525 = vmatprep.mubr.f32.mxu0 0.0
        %526 = vmatmul.mubr.f32.gmra.mrb[0].mxu0 %v436
        %v527 = vpop.f32.mrb[0].mxu0
        %v528 = vadd.f32 0.0, %v527
        %v529 = vpop.f32.mrb[0].mxu0
        %530 = vmatprep.mubr.f32.mxu0 0.0
        %531 = vmatmul.mubr.f32.gmra.mrb[0].mxu0 %v437
        %v532 = vpop.f32.mrb[0].mxu0
        %v533 = vadd.f32 0.0, %v532
        %v534 = vpop.f32.mrb[0].mxu0
        %535 = vmatprep.mubr.f32.mxu0 0.0
        %536 = vmatmul.mubr.f32.gmra.mrb[0].mxu0 %v438
        %v537 = vpop.f32.mrb[0].mxu0
        %v538 = vadd.f32 0.0, %v537
        %v539 = vpop.f32.mrb[0].mxu0
        %540 = vmatprep.mubr.f32.mxu0 0.0
        %541 = vmatmul.mubr.f32.gmra.mrb[0].mxu0 %v439
        %v542 = vpop.f32.mrb[0].mxu0
        %v543 = vadd.f32 0.0, %v542
        %v544 = vpop.f32.mrb[0].mxu0
        %545 = vmatprep.mubr.f32.mxu0 0.0
        %546 = vmatmul.mubr.f32.gmra.mrb[0].mxu0 %v440
        %v547 = vpop.f32.mrb[0].mxu0
        %v548 = vadd.f32 0.0, %v547
        %v549 = vpop.f32.mrb[0].mxu0
        %550 = vmatprep.mubr.f32.mxu0 0.0
        %551 = vmatmul.mubr.f32.gmra.mrb[0].mxu0 %v441
        %v552 = vpop.f32.mrb[0].mxu0
        %v553 = vadd.f32 0.0, %v552
        %v554 = vpop.f32.mrb[0].mxu0
        %555 = vmatprep.mubr.f32.mxu0 0.0
        %556 = vmatmul.mubr.f32.gmra.mrb[0].mxu0 %v442
        %v557 = vpop.f32.mrb[0].mxu0
        %v558 = vadd.f32 0.0, %v557
        %v559 = vpop.f32.mrb[0].mxu0
        %560 = vmatprep.mubr.f32.mxu0 0.0
        %561 = vmatmul.mubr.f32.gmra.mrb[0].mxu0 %v443
        %v562 = vpop.f32.mrb[0].mxu0
        %v563 = vadd.f32 0.0, %v562
        %v564 = vpop.f32.mrb[0].mxu0
        %565 = vdwg.mxu0
        %v566 = vld [vmem:[%s371] sm:$0xff]
        %v568 = vcombine.high %v566, %v566
        %v570 = vunpack.c.l.s4 1966171168
        %v571 = vunpack.c.0.s8 %v570
        %v572 = vlaneseq
        %v573 = vshrl.u32 %v572, 7
        %v574 = vsub.s32 %v571, %v573
        %v575 = vrot.slane %v566, %v574
        %v577 = vunpack.c.l.s4 1966171168
        %v578 = vunpack.c.0.s8 %v577
        %v579 = vlaneseq
        %v580 = vshrl.u32 %v579, 7
        %v581 = vsub.s32 %v578, %v580
        %v582 = vrot.slane %v568, %v581
        %v583 = vcombine.high %v575, %v575
        %v584 = vcombine.high %v582, %v582
        %v586 = vunpack.c.l.s4 1966171168
        %v587 = vunpack.c.0.s8 %v586
        %v588 = vlaneseq
        %v589 = vshrl.u32 %v588, 7
        %v590 = vsub.s32 %v587, %v589
        %v591 = vrot.slane %v575, %v590
        %v593 = vunpack.c.l.s4 1966171168
        %v594 = vunpack.c.0.s8 %v593
        %v595 = vlaneseq
        %v596 = vshrl.u32 %v595, 7
        %v597 = vsub.s32 %v594, %v596
        %v598 = vrot.slane %v582, %v597
        %v600 = vunpack.c.l.s4 1966171168
        %v601 = vunpack.c.0.s8 %v600
        %v602 = vlaneseq
        %v603 = vshrl.u32 %v602, 7
        %v604 = vsub.s32 %v601, %v603
        %v605 = vrot.slane %v583, %v604
        %v607 = vunpack.c.l.s4 1966171168
        %v608 = vunpack.c.0.s8 %v607
        %v609 = vlaneseq
        %v610 = vshrl.u32 %v609, 7
        %v611 = vsub.s32 %v608, %v610
        %v612 = vrot.slane %v584, %v611
        %v613 = vcombine.high %v591, %v591
        %v614 = vcombine.high %v598, %v598
        %v615 = vcombine.high %v605, %v605
        %v616 = vcombine.high %v612, %v612
        %v617 = vlaneseq
        %v618 = vshrl.u32 %v617, 7
        %v619 = vsub.s32 0, %v618
        %v620 = vrot.slane %v591, %v619
        %v621 = vlaneseq
        %v622 = vshrl.u32 %v621, 7
        %v623 = vsub.s32 0, %v622
        %v624 = vrot.slane %v605, %v623
        %v625 = vlaneseq
        %v626 = vshrl.u32 %v625, 7
        %v627 = vsub.s32 0, %v626
        %v628 = vrot.slane %v613, %v627
        %v629 = vlaneseq
        %v630 = vshrl.u32 %v629, 7
        %v631 = vsub.s32 0, %v630
        %v632 = vrot.slane %v615, %v631
        %v633 = vlaneseq
        %v634 = vshrl.u32 %v633, 7
        %v635 = vsub.s32 0, %v634
        %v636 = vrot.slane %v598, %v635
        %v637 = vlaneseq
        %v638 = vshrl.u32 %v637, 7
        %v639 = vsub.s32 0, %v638
        %v640 = vrot.slane %v612, %v639
        %v641 = vlaneseq
        %v642 = vshrl.u32 %v641, 7
        %v643 = vsub.s32 0, %v642
        %v644 = vrot.slane %v614, %v643
        %v645 = vlaneseq
        %v646 = vshrl.u32 %v645, 7
        %v647 = vsub.s32 0, %v646
        %v648 = vrot.slane %v616, %v647
        %v657 = vadd.f32 %v528, %v620
        %v658 = vadd.f32 %v533, %v624
        %v659 = vadd.f32 %v538, %v628
        %v660 = vadd.f32 %v543, %v632
        %v661 = vadd.f32 %v548, %v636
        %v662 = vadd.f32 %v553, %v640
        %v663 = vadd.f32 %v558, %v644
        %v664 = vadd.f32 %v563, %v648
        %v665 = vxor.u32 %v657, 2147483648
        %v666 = vxor.u32 %v658, 2147483648
        %v667 = vxor.u32 %v659, 2147483648
        %v668 = vxor.u32 %v660, 2147483648
        %v669 = vxor.u32 %v661, 2147483648
        %v670 = vxor.u32 %v662, 2147483648
        %v671 = vxor.u32 %v663, 2147483648
        %v672 = vxor.u32 %v664, 2147483648
        %v673 = vmul.f32 %v665, 1.442695
        %v674 = vpow.pop %v673
        %v675 = vmul.f32 %v666, 1.442695
        %v676 = vpow.pop %v675
        %v677 = vmul.f32 %v667, 1.442695
        %v678 = vpow.pop %v677
        %v679 = vmul.f32 %v668, 1.442695
        %v680 = vpow.pop %v679
        %v681 = vmul.f32 %v669, 1.442695
        %v682 = vpow.pop %v681
        %v683 = vmul.f32 %v670, 1.442695
        %v684 = vpow.pop %v683
        %v685 = vmul.f32 %v671, 1.442695
        %v686 = vpow.pop %v685
        %v687 = vmul.f32 %v672, 1.442695
        %v688 = vpow.pop %v687
        %v689 = vadd.f32 %v674, 1.0
        %v690 = vadd.f32 %v676, 1.0
        %v691 = vadd.f32 %v678, 1.0
        %v692 = vadd.f32 %v680, 1.0
        %v693 = vadd.f32 %v682, 1.0
        %v694 = vadd.f32 %v684, 1.0
        %v695 = vadd.f32 %v686, 1.0
        %v696 = vadd.f32 %v688, 1.0
        %v697 = vrcp.pop %v689
        %v698 = vmul.f32 1.0, %v697
        %v699 = vrcp.pop %v690
        %v700 = vmul.f32 1.0, %v699
        %v701 = vrcp.pop %v691
        %v702 = vmul.f32 1.0, %v701
        %v703 = vrcp.pop %v692
        %v704 = vmul.f32 1.0, %v703
        %v705 = vrcp.pop %v693
        %v706 = vmul.f32 1.0, %v705
        %v707 = vrcp.pop %v694
        %v708 = vmul.f32 1.0, %v707
        %v709 = vrcp.pop %v695
        %v710 = vmul.f32 1.0, %v709
        %v711 = vrcp.pop %v696
        %v712 = vmul.f32 1.0, %v711
        %v713 = vld [vmem:[#allocation12] sm:$0x1]
        %v715 = vlaneseq
        %v716 = vshrl.u32 %v715, 7
        %v717 = vsub.s32 0, %v716
        %v718 = vrot.slane %v713, %v717
        %v720 = vmul.f32 %v698, %v718
        %v721 = vmul.f32 %v700, %v718
        %v722 = vmul.f32 %v702, %v718
        %v723 = vmul.f32 %v704, %v718
        %v724 = vmul.f32 %v706, %v718
        %v725 = vmul.f32 %v708, %v718
        %v726 = vmul.f32 %v710, %v718
        %v727 = vmul.f32 %v712, %v718
        %728 = vadd.xlane.f32.xlu0 %v720
        %v729 = vpop.xlane.xlu0 %728
        %730 = vadd.xlane.f32.xlu0 %v721
        %v731 = vpop.xlane.xlu0 %730
        %732 = vadd.xlane.f32.xlu0 %v722
        %v733 = vpop.xlane.xlu0 %732
        %734 = vadd.xlane.f32.xlu0 %v723
        %v735 = vpop.xlane.xlu0 %734
        %736 = vadd.xlane.f32.xlu0 %v724
        %v737 = vpop.xlane.xlu0 %736
        %738 = vadd.xlane.f32.xlu0 %v725
        %v739 = vpop.xlane.xlu0 %738
        %740 = vadd.xlane.f32.xlu0 %v726
        %v741 = vpop.xlane.xlu0 %740
        %742 = vadd.xlane.f32.xlu0 %v727
        %v743 = vpop.xlane.xlu0 %742
        %v744 = vld [vmem:[#allocation2] sm:$0x1]
        %v746 = vlaneseq
        %v747 = vshrl.u32 %v746, 7
        %v748 = vsub.s32 0, %v747
        %v749 = vrot.slane %v744, %v748
        %750 = vset.pattern.permute.xlu0 0
        %751 = vperm.xlu0 %750, %v749
        %v752 = vpop.permute.xlu0 %751
        %v754 = vadd.f32 %v729, %v752
        %v755 = vadd.f32 %v731, %v752
        %v756 = vadd.f32 %v733, %v752
        %v757 = vadd.f32 %v735, %v752
        %v758 = vadd.f32 %v737, %v752
        %v759 = vadd.f32 %v739, %v752
        %v760 = vadd.f32 %v741, %v752
        %v761 = vadd.f32 %v743, %v752
        %v762 = vxor.u32 %v754, 2147483648
        %v763 = vxor.u32 %v755, 2147483648
        %v764 = vxor.u32 %v756, 2147483648
        %v765 = vxor.u32 %v757, 2147483648
        %v766 = vxor.u32 %v758, 2147483648
        %v767 = vxor.u32 %v759, 2147483648
        %v768 = vxor.u32 %v760, 2147483648
        %v769 = vxor.u32 %v761, 2147483648
        %v770 = vmul.f32 %v762, 1.442695
        %v771 = vpow.pop %v770
        %v772 = vmul.f32 %v763, 1.442695
        %v773 = vpow.pop %v772
        %v774 = vmul.f32 %v764, 1.442695
        %v775 = vpow.pop %v774
        %v776 = vmul.f32 %v765, 1.442695
        %v777 = vpow.pop %v776
        %v778 = vmul.f32 %v766, 1.442695
        %v779 = vpow.pop %v778
        %v780 = vmul.f32 %v767, 1.442695
        %v781 = vpow.pop %v780
        %v782 = vmul.f32 %v768, 1.442695
        %v783 = vpow.pop %v782
        %v784 = vmul.f32 %v769, 1.442695
        %v785 = vpow.pop %v784
        %v786 = vadd.f32 %v771, 1.0
        %v787 = vadd.f32 %v773, 1.0
        %v788 = vadd.f32 %v775, 1.0
        %v789 = vadd.f32 %v777, 1.0
        %v790 = vadd.f32 %v779, 1.0
        %v791 = vadd.f32 %v781, 1.0
        %v792 = vadd.f32 %v783, 1.0
        %v793 = vadd.f32 %v785, 1.0
        %v794 = vrcp.pop %v786
        %v795 = vmul.f32 1.0, %v794
        %v796 = vrcp.pop %v787
        %v797 = vmul.f32 1.0, %v796
        %v798 = vrcp.pop %v788
        %v799 = vmul.f32 1.0, %v798
        %v800 = vrcp.pop %v789
        %v801 = vmul.f32 1.0, %v800
        %v802 = vrcp.pop %v790
        %v803 = vmul.f32 1.0, %v802
        %v804 = vrcp.pop %v791
        %v805 = vmul.f32 1.0, %v804
        %v806 = vrcp.pop %v792
        %v807 = vmul.f32 1.0, %v806
        %v808 = vrcp.pop %v793
        %v809 = vmul.f32 1.0, %v808
        %vm810 = vcmask 64512
        %v811 = vsel %vm810, %v444, 0.0
        %812 = vadd.xlane.f32.xlu0 %v811
        %v813 = vpop.xlane.xlu0 %812
        %v814 = vsub.f32 8.0, %v813
        %v815 = vmax.f32 %v814, 1.0
        %v816 = vrcp.pop %v815
        %v818 = vlaneseq
        %v819 = vshrl.u32 %v818, 7
        %v820 = vsub.s32 0, %v819
        %v821 = vrot.slane %v816, %v820
        %v822 = vlaneseq
        %v823 = vshrl.u32 %v822, 7
        %v824 = vsub.s32 1, %v823
        %v825 = vrot.slane %v816, %v824
        %v826 = vlaneseq
        %v827 = vshrl.u32 %v826, 7
        %v828 = vsub.s32 2, %v827
        %v829 = vrot.slane %v816, %v828
        %v830 = vlaneseq
        %v831 = vshrl.u32 %v830, 7
        %v832 = vsub.s32 3, %v831
        %v833 = vrot.slane %v816, %v832
        %v834 = vlaneseq
        %v835 = vshrl.u32 %v834, 7
        %v836 = vsub.s32 4, %v835
        %v837 = vrot.slane %v816, %v836
        %v838 = vlaneseq
        %v839 = vshrl.u32 %v838, 7
        %v840 = vsub.s32 5, %v839
        %v841 = vrot.slane %v816, %v840
        %v842 = vlaneseq
        %v843 = vshrl.u32 %v842, 7
        %v844 = vsub.s32 6, %v843
        %v845 = vrot.slane %v816, %v844
        %v846 = vlaneseq
        %v847 = vshrl.u32 %v846, 7
        %v848 = vsub.s32 7, %v847
        %v849 = vrot.slane %v816, %v848
        %v858 = vmul.f32 %v795, %v821
        %v859 = vmul.f32 %v797, %v825
        %v860 = vmul.f32 %v799, %v829
        %v861 = vmul.f32 %v801, %v833
        %v862 = vmul.f32 %v803, %v837
        %v863 = vmul.f32 %v805, %v841
        %v864 = vmul.f32 %v807, %v845
        %v865 = vmul.f32 %v809, %v849
        %vm866 = vcmp.gt.f32.partialorder %v444, 0.0
        %875 = vset.pattern.permute.xlu0 0
        %876 = vperm.xlu0 %875, %v858
        %v877 = vpop.permute.xlu0 %876
        %878 = vset.pattern.permute.xlu0 0
        %879 = vperm.xlu0 %878, %v859
        %v880 = vpop.permute.xlu0 %879
        %881 = vset.pattern.permute.xlu0 0
        %882 = vperm.xlu0 %881, %v860
        %v883 = vpop.permute.xlu0 %882
        %884 = vset.pattern.permute.xlu0 0
        %885 = vperm.xlu0 %884, %v861
        %v886 = vpop.permute.xlu0 %885
        %887 = vset.pattern.permute.xlu0 0
        %888 = vperm.xlu0 %887, %v862
        %v889 = vpop.permute.xlu0 %888
        %890 = vset.pattern.permute.xlu0 0
        %891 = vperm.xlu0 %890, %v863
        %v892 = vpop.permute.xlu0 %891
        %893 = vset.pattern.permute.xlu0 0
        %894 = vperm.xlu0 %893, %v864
        %v895 = vpop.permute.xlu0 %894
        %896 = vset.pattern.permute.xlu0 0
        %897 = vperm.xlu0 %896, %v865
        %v898 = vpop.permute.xlu0 %897
        %v899 = vlaneseq
        %v900 = vand.u32 %v899, 127
        %v901 = vlaneseq
        %v902 = vshrl.u32 %v901, 7
        %v903 = vsub.s32 %v900, %v902
        %v904 = vrot.slane %v877, %v903
        %v905 = vlaneseq
        %v906 = vshrl.u32 %v905, 7
        %v907 = vsub.s32 %v900, %v906
        %v908 = vrot.slane %v880, %v907
        %v909 = vlaneseq
        %v910 = vshrl.u32 %v909, 7
        %v911 = vsub.s32 %v900, %v910
        %v912 = vrot.slane %v883, %v911
        %v913 = vlaneseq
        %v914 = vshrl.u32 %v913, 7
        %v915 = vsub.s32 %v900, %v914
        %v916 = vrot.slane %v886, %v915
        %v917 = vlaneseq
        %v918 = vshrl.u32 %v917, 7
        %v919 = vsub.s32 %v900, %v918
        %v920 = vrot.slane %v889, %v919
        %v921 = vlaneseq
        %v922 = vshrl.u32 %v921, 7
        %v923 = vsub.s32 %v900, %v922
        %v924 = vrot.slane %v892, %v923
        %v925 = vlaneseq
        %v926 = vshrl.u32 %v925, 7
        %v927 = vsub.s32 %v900, %v926
        %v928 = vrot.slane %v895, %v927
        %v929 = vlaneseq
        %v930 = vshrl.u32 %v929, 7
        %v931 = vsub.s32 %v900, %v930
        %v932 = vrot.slane %v898, %v931
        %vm933 = vcmask 1041409
        %v934 = vsel %vm933, %v908, %v904
        %vm935 = vcmask 1042434
        %v936 = vsel %vm935, %v912, %v934
        %vm937 = vcmask 1043459
        %v938 = vsel %vm937, %v916, %v936
        %vm939 = vcmask 1044484
        %v940 = vsel %vm939, %v920, %v938
        %vm941 = vcmask 1045509
        %v942 = vsel %vm941, %v924, %v940
        %vm943 = vcmask 1046534
        %v944 = vsel %vm943, %v928, %v942
        %vm945 = vcmask 1047559
        %v946 = vsel %vm945, %v932, %v944
        %v948 = vsel %vm866, 0.0, %v946
        %v949 = vlaneseq
        %v950 = vshrl.u32 %v949, 7
        %v951 = vsub.s32 0, %v950
        %v952 = vrot.slane %v948, %v951
        %954 = vbcast.lane.b32.xlu0 %v952, 256
        %v955 = vpop.permute.xlu0 %954
        %v956 = vlaneseq
        %v957 = vshrl.u32 %v956, 7
        %v958 = vsub.s32 1, %v957
        %v959 = vrot.slane %v948, %v958
        %961 = vbcast.lane.b32.xlu0 %v959, 256
        %v962 = vpop.permute.xlu0 %961
        %v963 = vlaneseq
        %v964 = vshrl.u32 %v963, 7
        %v965 = vsub.s32 2, %v964
        %v966 = vrot.slane %v948, %v965
        %968 = vbcast.lane.b32.xlu0 %v966, 256
        %v969 = vpop.permute.xlu0 %968
        %v970 = vlaneseq
        %v971 = vshrl.u32 %v970, 7
        %v972 = vsub.s32 3, %v971
        %v973 = vrot.slane %v948, %v972
        %975 = vbcast.lane.b32.xlu0 %v973, 256
        %v976 = vpop.permute.xlu0 %975
        %v977 = vlaneseq
        %v978 = vshrl.u32 %v977, 7
        %v979 = vsub.s32 4, %v978
        %v980 = vrot.slane %v948, %v979
        %982 = vbcast.lane.b32.xlu0 %v980, 256
        %v983 = vpop.permute.xlu0 %982
        %v984 = vlaneseq
        %v985 = vshrl.u32 %v984, 7
        %v986 = vsub.s32 5, %v985
        %v987 = vrot.slane %v948, %v986
        %989 = vbcast.lane.b32.xlu0 %v987, 256
        %v990 = vpop.permute.xlu0 %989
        %v991 = vlaneseq
        %v992 = vshrl.u32 %v991, 7
        %v993 = vsub.s32 6, %v992
        %v994 = vrot.slane %v948, %v993
        %996 = vbcast.lane.b32.xlu0 %v994, 256
        %v997 = vpop.permute.xlu0 %996
        %v998 = vlaneseq
        %v999 = vshrl.u32 %v998, 7
        %v1000 = vsub.s32 7, %v999
        %v1001 = vrot.slane %v948, %v1000
        %1003 = vbcast.lane.b32.xlu0 %v1001, 256
        %v1004 = vpop.permute.xlu0 %1003
        %v1005 = vmul.f32 %v955, %v436
        %v1006 = vmul.f32 %v962, %v437
        %v1007 = vmul.f32 %v969, %v438
        %v1008 = vmul.f32 %v976, %v439
        %v1009 = vmul.f32 %v983, %v440
        %v1010 = vmul.f32 %v990, %v441
        %v1011 = vmul.f32 %v997, %v442
        %v1012 = vmul.f32 %v1004, %v443
        %v1013 = vrot.slane %v1005, 4
        %v1014 = vadd.f32 %v1005, %v1013
        %v1015 = vrot.slane %v1014, 2
        %v1016 = vadd.f32 %v1014, %v1015
        %v1017 = vrot.slane %v1016, 1
        %v1018 = vadd.f32 %v1016, %v1017
        %v1019 = vrot.slane %v1006, 4
        %v1020 = vadd.f32 %v1006, %v1019
        %v1021 = vrot.slane %v1020, 2
        %v1022 = vadd.f32 %v1020, %v1021
        %v1023 = vrot.slane %v1022, 1
        %v1024 = vadd.f32 %v1022, %v1023
        %v1025 = vrot.slane %v1007, 4
        %v1026 = vadd.f32 %v1007, %v1025
        %v1027 = vrot.slane %v1026, 2
        %v1028 = vadd.f32 %v1026, %v1027
        %v1029 = vrot.slane %v1028, 1
        %v1030 = vadd.f32 %v1028, %v1029
        %v1031 = vrot.slane %v1008, 4
        %v1032 = vadd.f32 %v1008, %v1031
        %v1033 = vrot.slane %v1032, 2
        %v1034 = vadd.f32 %v1032, %v1033
        %v1035 = vrot.slane %v1034, 1
        %v1036 = vadd.f32 %v1034, %v1035
        %v1037 = vrot.slane %v1009, 4
        %v1038 = vadd.f32 %v1009, %v1037
        %v1039 = vrot.slane %v1038, 2
        %v1040 = vadd.f32 %v1038, %v1039
        %v1041 = vrot.slane %v1040, 1
        %v1042 = vadd.f32 %v1040, %v1041
        %v1043 = vrot.slane %v1010, 4
        %v1044 = vadd.f32 %v1010, %v1043
        %v1045 = vrot.slane %v1044, 2
        %v1046 = vadd.f32 %v1044, %v1045
        %v1047 = vrot.slane %v1046, 1
        %v1048 = vadd.f32 %v1046, %v1047
        %v1049 = vrot.slane %v1011, 4
        %v1050 = vadd.f32 %v1011, %v1049
        %v1051 = vrot.slane %v1050, 2
        %v1052 = vadd.f32 %v1050, %v1051
        %v1053 = vrot.slane %v1052, 1
        %v1054 = vadd.f32 %v1052, %v1053
        %v1055 = vrot.slane %v1012, 4
        %v1056 = vadd.f32 %v1012, %v1055
        %v1057 = vrot.slane %v1056, 2
        %v1058 = vadd.f32 %v1056, %v1057
        %v1059 = vrot.slane %v1058, 1
        %v1060 = vadd.f32 %v1058, %v1059
        %v1061 = vsel %vm810, %v948, 0.0
        %1062 = vadd.xlane.f32.xlu0 %v1061
        %v1063 = vpop.xlane.xlu0 %1062
        %v1064 = vsub.f32 1.0, %v1063
        %v1065 = vmul.f32 %v1064, %v435
        %v1067 = vrot.slane %v1065, 1
        %v1068 = vrot.slane %v1065, 2
        %v1069 = vrot.slane %v1065, 3
        %v1070 = vrot.slane %v1065, 4
        %v1071 = vrot.slane %v1065, 5
        %v1072 = vrot.slane %v1065, 6
        %v1073 = vrot.slane %v1065, 7
        %v1082 = vadd.f32 %v1018, %v1065
        %v1083 = vadd.f32 %v1024, %v1067
        %v1084 = vadd.f32 %v1030, %v1068
        %v1085 = vadd.f32 %v1036, %v1069
        %v1086 = vadd.f32 %v1042, %v1070
        %v1087 = vadd.f32 %v1048, %v1071
        %v1088 = vadd.f32 %v1054, %v1072
        %v1089 = vadd.f32 %v1060, %v1073
        %v1098 = vrot.slane %v1083, 7
        %v1099 = vsel %vm933, %v1098, %v1082
        %v1100 = vrot.slane %v1084, 6
        %v1101 = vsel %vm935, %v1100, %v1099
        %v1102 = vrot.slane %v1085, 5
        %v1103 = vsel %vm937, %v1102, %v1101
        %v1104 = vrot.slane %v1086, 4
        %v1105 = vsel %vm939, %v1104, %v1103
        %v1106 = vrot.slane %v1087, 3
        %v1107 = vsel %vm941, %v1106, %v1105
        %v1108 = vrot.slane %v1088, 2
        %v1109 = vsel %vm943, %v1108, %v1107
        %v1110 = vrot.slane %v1089, 1
        %v1111 = vsel %vm945, %v1110, %v1109
        %1113 = vst [vmem:[%s433] sm:$0xff] %v1111
        %s1114 = sand.u32 %s208, 1
        %s1115 = scalar_lea.sflag [#allocation5], %s1114
        %s1116 = sand.u32 %s208, 1
        %s1117 = smul.addr %s1116, 8
        %s1118 = scalar_lea.vmem [#allocation14], %s1117
        // Predicated region
        $region73: #{tpu_custom_call.1} parent=47 // pred_check
          %p1119 = pneg %p218
        $region74: #{tpu_custom_call.1} parent=47 // pred_check_branch
          %1121 = sbr.rel (%p1119) target = $region76
        $region75: #{tpu_custom_call.1} parent=47 // pred_region
          %s1123 = ssub.s32 128, 128
          %1124 = vsyncadd %s1115, %s1123
          %s1125 = smul.addr %s33, 128
          %s1126 = scalar_lea.hbm %s7, %s1125
          %s1128 = sshll.u32 %s1118, 4
          %s1129 = int_to_ptr.vmem [resolvable:$true] %s1128
          %1131 = dma.vmem_to_hbm [thread:$0]  %s1129, 128, %s1126, %s1115
        $region76: #{tpu_custom_call.1} parent=47 // pred_fallthru
          _
      $region48: #{tpu_custom_call.1} parent=5 // pred_fallthru
        _
      %p1132 = scmp.le.s32.totalorder 2, %s28
      // Predicated region
      $region77: #{tpu_custom_call.1} parent=5 // pred_check
        %p1133 = pneg %p1132
      $region78: #{tpu_custom_call.1} parent=5 // pred_check_branch
        %1135 = sbr.rel (%p1133) target = $region80
      $region79: #{tpu_custom_call.1} parent=5 // pred_region
        %s1136 = ssub.s32 %s28, 2
        // Predicated region
        $region81: #{tpu_custom_call.1} parent=79 // pred_check
          %p1137 = pneg %p224
        $region82: #{tpu_custom_call.1} parent=79 // pred_check_branch
          %1139 = sbr.rel (%p1137) target = $region84
        $region83: #{tpu_custom_call.1} parent=79 // pred_region
          %s1140 = sand.u32 %s209, 1
          %s1141 = scalar_lea.sflag [#allocation5], %s1140
          %s1142 = sand.u32 %s209, 1
          %s1143 = smul.addr %s1142, 8
          %s1144 = scalar_lea.vmem [#allocation14], %s1143
          %1145 = dma.done %s1141, 128
        $region84: #{tpu_custom_call.1} parent=79 // pred_fallthru
          _
      $region80: #{tpu_custom_call.1} parent=5 // pred_fallthru
        _
    $region6: #{tpu_custom_call.1} parent=1 // loop_footer
      %s32 = sadd.s32 1, %s28
    $region7: #{tpu_custom_call.1} parent=1 // loop_footer_branch
      %27 = sbr.rel target = $region3
    $region8: #{tpu_custom_call.1} parent=1 // loop_exit
      _
    %1146 = vsyncpa [#allocation4], 1
    %s1147 = scalar_lea.sflag [#allocation4], 1
    %1148 = vsyncpa %s1147, 1
    %1149 = vsyncpa [#allocation7], 1
    %s1150 = scalar_lea.sflag [#allocation7], 1
    %1151 = vsyncpa %s1150, 1
    %1152 = vsyncpa [#allocation10], 1
    %s1153 = scalar_lea.sflag [#allocation10], 1
    %1154 = vsyncpa %s1153, 1
    %1155 = vsyncpa [#allocation13], 1
    %1156 = vsyncpa [#allocation5], 1
    %s1157 = scalar_lea.sflag [#allocation5], 1
    %1158 = vsyncpa %s1157, 1

</llo_original>
